<compile_context>
chip_gen: v6e
topology: v6e:2x2x1
jax: 0.10.0
libtpu: 0.0.40
codegen_flags: <defaults>
</compile_context>

<pallas_src>
import functools
import math

import jax
import jax.numpy as jnp
from jax.experimental import pallas as pl
from jax.experimental.pallas import tpu as pltpu


# ---------------------------------------------------------------------------
# Small helpers: geometry, VMEM budget, channel-tile picker
# ---------------------------------------------------------------------------

def _cdiv(a, b):
    return -(-a // b)


def _round_up(x, m):
    return (x + m - 1) // m * m


def _unfold_geometry(T, window_size, stride, dilation, pad):
    padding = ((window_size + (window_size - 1) * (dilation - 1) - 1) // 2
               if pad else 0)
    L = (T + 2 * padding - dilation * (window_size - 1) - 1) // stride + 1
    assert L > 0, "no valid temporal windows"
    return padding, L


def _vmem_limits():
    """Generation-aware VMEM sizing: (tile budget bytes, scoped vmem limit)."""
    cap = 64 * 1024 * 1024                       # conservative fallback (v7x-sized)
    try:
        info = pltpu.get_tpu_info()
        cap = int(getattr(info, "vmem_capacity_bytes", cap) or cap)
    except Exception:
        pass
    # Request ~70% of physical as the scoped limit (>= default 32 MiB, <= 100 MiB)
    # and size tiles against ~80% of that so pipelining buffers + scratch fit.
    limit = max(32 * 1024 * 1024, min(int(cap * 0.70), 100 * 1024 * 1024))
    budget = int(limit * 0.80)
    return budget, limit


def _pick_c_tile(C, n_outer, tile_bytes, budget, min_grid=4):
    """Largest channel tile (multiple of 8, or all of C) whose pipelined tiles
    fit `budget`, then shrunk (when possible) so the total grid has at least
    `min_grid` steps so both v7x TensorCores get parallel work.  The tile does
    NOT have to divide C (grid uses cdiv; the last block may be partial)."""
    if C <= 8:
        cands = [C]
    else:
        cands = sorted({C} | set(range(8, C, 8)), reverse=True)
    choice = None
    for c in cands:
        if tile_bytes(c) <= budget:
            choice = c
            break
    if choice is None:
        choice = cands[-1]
    idx = cands.index(choice)
    while n_outer * _cdiv(C, choice) < min_grid and idx + 1 < len(cands):
        idx += 1
        choice = cands[idx]
    return choice


# ---------------------------------------------------------------------------
# Kernel 1: fused UnfoldTemporalWindows + 'nwutv,nctuv->nctv' contraction
#           (stride == 1).  Lane-dense flat (C, T*V) -> (C, L*V) layout.
# ---------------------------------------------------------------------------

def _make_fused_kernel(c_tile, T, V, L, ws, dilation, padding):
    def kernel(w_ref, v_ref, o_ref, acc_ref):
        # w_ref:   (ws, L*V)     f32  window weights, already summed over 'w'
        # v_ref:   (c_tile, T*V) in dtype
        # o_ref:   (c_tile, L*V)
        # acc_ref: (c_tile, L*V) f32 scratch accumulator
        acc_ref[...] = jnp.zeros_like(acc_ref)
        for u in range(ws):                           # static, ws is tiny
            off = u * dilation - padding              # temporal row offset (< 0 allowed)
            l_lo = max(0, -off)                       # valid output rows for window u
            l_hi = min(L, T - off)
            if l_hi <= l_lo:                          # window entirely in zero padding
                continue
            width = (l_hi - l_lo) * V
            w_u = w_ref[u:u + 1, l_lo * V:l_lo * V + width]              # (1, width)
            v_s = v_ref[:, (l_lo + off) * V:(l_lo + off) * V + width]    # (c_tile, width)
            # Direct sub-view accumulation: no concat chains, no full-block temps.
            acc_ref[:, l_lo * V:l_lo * V + width] += w_u * v_s.astype(jnp.float32)
        o_ref[...] = acc_ref[...].astype(o_ref.dtype)
    return kernel


def unfold_weighted_sum(v, wsum, window_size, window_dilation=1, pad=True,
                        *, c_tile=None, min_grid=4):
    """out[n,c,l,j] = sum_u wsum[n,u,l,j] * zero_pad_T(v)[n, c, l + u*dil - p, j]

    Fuses UnfoldTemporalWindows(stride=1) with the TemporalAttentionConv einsum
    so the window-expanded tensor is never materialized in HBM.
    v: (N, C, T, V); wsum: (N, ws, L, V)  ->  (N, C, L, V)
    """
    N, C, T, V = v.shape
    ws = window_size
    padding, L = _unfold_geometry(T, ws, 1, window_dilation, pad)
    assert wsum.shape == (N, ws, L, V), (wsum.shape, (N, ws, L, V))

    itemsize = jnp.dtype(v.dtype).itemsize
    budget, vmem_limit = _vmem_limits()

    def tile_bytes(c):
        cp = _round_up(max(c, 1), 8)
        in_b = cp * _round_up(T * V, 128) * itemsize
        out_b = cp * _round_up(L * V, 128) * itemsize
        acc_b = cp * _round_up(L * V, 128) * 4
        w_b = _round_up(ws, 8) * _round_up(L * V, 128) * 4
        return 2 * (in_b + out_b + w_b) + acc_b       # x2: double-buffered pipeline

    if c_tile is None:
        c_tile = _pick_c_tile(C, N, tile_bytes, budget, min_grid)

    v_flat = v.reshape(N, C, T * V)                   # free: T, V are contiguous
    w_flat = wsum.astype(jnp.float32).reshape(N, ws, L * V)

    kernel = _make_fused_kernel(c_tile, T, V, L, ws, window_dilation, padding)
    cost = pl.CostEstimate(
        flops=2 * N * C * L * V * ws, transcendentals=0,
        bytes_accessed=(N * C * (T + L) * V) * itemsize + N * ws * L * V * 4)

    out_flat = pl.pallas_call(
        kernel,
        out_shape=jax.ShapeDtypeStruct((N, C, L * V), v.dtype),
        grid_spec=pltpu.PrefetchScalarGridSpec(
            num_scalar_prefetch=0,
            grid=(N, _cdiv(C, c_tile)),
            in_specs=[
                pl.BlockSpec((None, ws, L * V), lambda n, c: (n, 0, 0)),
                pl.BlockSpec((None, c_tile, T * V), lambda n, c: (n, c, 0)),
            ],
            out_specs=pl.BlockSpec((None, c_tile, L * V), lambda n, c: (n, c, 0)),
            scratch_shapes=[pltpu.VMEM((c_tile, L * V), jnp.float32)],
        ),
        compiler_params=pltpu.CompilerParams(
            dimension_semantics=("parallel", "parallel"),
            vmem_limit_bytes=vmem_limit),
        cost_estimate=cost,
    )(w_flat, v_flat)

    return out_flat.reshape(N, C, L, V)


# ---------------------------------------------------------------------------
# Kernel 2: UnfoldTemporalWindows, stride == 1, lane-dense flat layout.
#           Emits window-major (N, C, ws, L, V) (trailing block dim ws*L*V).
# ---------------------------------------------------------------------------

def _make_unfold_flat_kernel(c_tile, T, V, L, ws, dilation, padding):
    LV = L * V

    def kernel(x_ref, o_ref):
        # x_ref: (c_tile, T*V); o_ref: (c_tile, ws*L*V)
        for w in range(ws):
            start = w * dilation - padding
            l_lo = max(0, -start)
            l_hi = min(L, T - start)
            base = w * LV
            if l_hi <= l_lo:                           # whole window inside the pad
                o_ref[:, base:base + LV] = jnp.zeros((c_tile, LV), o_ref.dtype)
                continue
            if l_lo > 0:                               # zero only the leading pad rows
                o_ref[:, base:base + l_lo * V] = jnp.zeros(
                    (c_tile, l_lo * V), o_ref.dtype)
            if l_hi < L:                               # zero only the trailing pad rows
                o_ref[:, base + l_hi * V:base + LV] = jnp.zeros(
                    (c_tile, (L - l_hi) * V), o_ref.dtype)
            # Full-lane row copy: contiguous flat slice -> contiguous flat slice.
            o_ref[:, base + l_lo * V:base + l_hi * V] = \
                x_ref[:, (l_lo + start) * V:(l_hi + start) * V]

    return kernel


# ---------------------------------------------------------------------------
# Kernel 3: UnfoldTemporalWindows, general stride (fallback), (..., T, V) layout
#           with direct per-window sub-view stores (no concatenation).
# ---------------------------------------------------------------------------

def _make_unfold_strided_kernel(c_tile, T, V, L, ws, stride, dilation, padding):
    def kernel(x_ref, o_ref):
        # x_ref: (c_tile, T, V); o_ref: (c_tile, L, ws*V)
        for w in range(ws):
            start = w * dilation - padding
            t_lo = max(0, (-start + stride - 1) // stride)
            t_hi = min(L, (T - 1 - start) // stride + 1)
            lane0 = w * V
            if t_hi <= t_lo:
                o_ref[:, :, lane0:lane0 + V] = jnp.zeros((c_tile, L, V), o_ref.dtype)
                continue
            if t_lo > 0:
                o_ref[:, 0:t_lo, lane0:lane0 + V] = jnp.zeros(
                    (c_tile, t_lo, V), o_ref.dtype)
            if t_hi < L:
                o_ref[:, t_hi:L, lane0:lane0 + V] = jnp.zeros(
                    (c_tile, L - t_hi, V), o_ref.dtype)
            r0 = start + t_lo * stride
            cnt = t_hi - t_lo
            if stride == 1:
                core = x_ref[:, r0:r0 + cnt, :]
            else:
                # TODO(synk): confirm strided pl.ds lowers to row-block DMA on v5e
                # Mosaic; switch to per-row copies there if it degrades.
                core = x_ref[:, pl.ds(r0, cnt, stride=stride), :]
            o_ref[:, t_lo:t_hi, lane0:lane0 + V] = core

    return kernel


def unfold_temporal_windows(x, window_size, window_stride, window_dilation=1,
                            pad=True, *, window_major=False, c_tile=None,
                            min_grid=4):
    """Pallas UnfoldTemporalWindows.forward.

    x: (N, C, T, V) -> (N, C, L, ws, V); window_major=True -> (N, C, ws, L, V).
    """
    N, C, T, V = x.shape
    ws = window_size
    padding, L = _unfold_geometry(T, ws, window_stride, window_dilation, pad)
    itemsize = jnp.dtype(x.dtype).itemsize
    budget, vmem_limit = _vmem_limits()
    cost = pl.CostEstimate(
        flops=0, transcendentals=0,
        bytes_accessed=(N * C * T * V + N * C * L * ws * V) * itemsize)
    cparams = pltpu.CompilerParams(
        dimension_semantics=("parallel", "parallel"),
        vmem_limit_bytes=vmem_limit)

    if window_stride == 1:
        # Lane-dense path: flat (C, T*V) in -> window-major flat (C, ws*L*V) out.
        def tile_bytes(c):
            cp = _round_up(max(c, 1), 8)
            return 2 * (cp * _round_up(T * V, 128)
                        + cp * _round_up(ws * L * V, 128)) * itemsize

        ct = c_tile or _pick_c_tile(C, N, tile_bytes, budget, min_grid)
        kernel = _make_unfold_flat_kernel(ct, T, V, L, ws, window_dilation, padding)
        out = pl.pallas_call(
            kernel,
            out_shape=jax.ShapeDtypeStruct((N, C, ws * L * V), x.dtype),
            grid_spec=pltpu.PrefetchScalarGridSpec(
                num_scalar_prefetch=0,
                grid=(N, _cdiv(C, ct)),
                in_specs=[pl.BlockSpec((None, ct, T * V), lambda n, c: (n, c, 0))],
                out_specs=pl.BlockSpec((None, ct, ws * L * V),
                                       lambda n, c: (n, c, 0)),
            ),
            compiler_params=cparams,
            cost_estimate=cost,
        )(x.reshape(N, C, T * V))
        out = out.reshape(N, C, ws, L, V)
        return out if window_major else jnp.transpose(out, (0, 1, 3, 2, 4))

    # stride > 1 fallback: (..., T, V) layout, strided row selection in-kernel.
    def tile_bytes(c):
        in_b = max(c, 1) * _round_up(T, 8) * _round_up(V, 128) * itemsize
        out_b = max(c, 1) * _round_up(L, 8) * _round_up(ws * V, 128) * itemsize
        return 2 * (in_b + out_b)

    ct = c_tile or _pick_c_tile(C, N, tile_bytes, budget, min_grid)
    kernel = _make_unfold_strided_kernel(ct, T, V, L, ws, window_stride,
                                         window_dilation, padding)
    out = pl.pallas_call(
        kernel,
        out_shape=jax.ShapeDtypeStruct((N, C, L, ws * V), x.dtype),
        grid_spec=pltpu.PrefetchScalarGridSpec(
            num_scalar_prefetch=0,
            grid=(N, _cdiv(C, ct)),
            in_specs=[pl.BlockSpec((None, ct, T, V), lambda n, c: (n, c, 0, 0))],
            out_specs=pl.BlockSpec((None, ct, L, ws * V),
                                   lambda n, c: (n, c, 0, 0)),
        ),
        compiler_params=cparams,
        cost_estimate=cost,
    )(x)
    out = out.reshape(N, C, L, ws, V)
    return jnp.transpose(out, (0, 1, 3, 2, 4)) if window_major else out


def unfold_temporal_windows_ref(x, window_size, window_stride,
                                window_dilation=1, pad=True):
    """Pure-JAX reference mirroring nn.Unfold semantics."""
    N, C, T, V = x.shape
    padding, L = _unfold_geometry(T, window_size, window_stride,
                                  window_dilation, pad)
    xp = jnp.pad(x, ((0, 0), (0, 0), (padding, padding), (0, 0)))
    windows = []
    for t in range(L):
        s = t * window_stride
        windows.append(
            jax.lax.slice(xp, (0, 0, s, 0),
                          (N, C, s + (window_size - 1) * window_dilation + 1, V),
                          strides=(1, 1, window_dilation, 1)))
    return jnp.stack(windows, axis=2)                 # (N, C, L, ws, V)


# ---------------------------------------------------------------------------
# Rest of TemporalAttentionConv.forward (plain JAX, standard MXU/VPU ops)
# ---------------------------------------------------------------------------

def _conv1x1(x, w, b):
    # x: (N, Cin, H, W); w: (Cout, Cin); b: (Cout,)
    return jnp.einsum('nchw,oc->nohw', x, w) + b[None, :, None, None]


def _batchnorm(x, p, eps=1e-5):
    # BatchNorm2d in inference (affine) form.
    gamma, beta, mean, var = p
    inv = gamma / jnp.sqrt(var + eps)
    return x * inv[None, :, None, None] + (beta - mean * inv)[None, :, None, None]


def init_temporal_attention_conv(key, in_channels, out_channels, kernel_size,
                                 stride=1, dilation=1):
    rel = in_channels // 8 if in_channels != 3 else 8
    ks = kernel_size
    keys = jax.random.split(key, 8)

    def conv_init(k, cout, cin):
        scale = 1.0 / math.sqrt(cin)
        kw, kb = jax.random.split(k)
        return (jax.random.uniform(kw, (cout, cin), jnp.float32, -scale, scale),
                jax.random.uniform(kb, (cout,), jnp.float32, -scale, scale))

    def bn_init(k, c):
        k1, k2 = jax.random.split(k)
        return (1.0 + 0.1 * jax.random.normal(k1, (c,), jnp.float32),  # gamma
                0.1 * jax.random.normal(k2, (c,), jnp.float32),        # beta
                jnp.zeros((c,), jnp.float32),                          # running mean
                jnp.ones((c,), jnp.float32))                           # running var

    # TODO(synk): num_scale > 1 grouped 1x1 convs not implemented (module default num_scale=1).
    params = dict(
        convV=conv_init(keys[0], rel, in_channels),
        convW=conv_init(keys[1], ks * ks, ks),
        conv=conv_init(keys[2], out_channels, rel),
        conv_bn=bn_init(keys[3], out_channels),
        bn=bn_init(keys[4], rel),
        res=conv_init(keys[5], rel, in_channels),
        res_bn=bn_init(keys[6], rel),
    )
    meta = dict(in_channels=in_channels, out_channels=out_channels, ks=ks,
                stride=stride, dilation=dilation, rel=rel)
    return params, meta


def _post_attention(out, res, params, meta):
    stride = meta['stride']
    if meta['in_channels'] == meta['out_channels'] and stride == 1:
        resid = res                                   # mirrors the PyTorch identity branch
    else:
        resid = _batchnorm(_conv1x1(res[:, :, ::stride, :], *params['res']),
                           params['res_bn'])
    out = _batchnorm(out, params['bn']) + resid
    out = jnp.where(out >= 0, out, 0.1 * out)         # LeakyReLU(0.1)
    out = _batchnorm(_conv1x1(out, *params['conv']), params['conv_bn'])
    return out


def temporal_attention_conv_forward(params, meta, x):
    """TemporalAttentionConv.forward with Pallas kernels on the unfold paths."""
    ks, stride, dilation = meta['ks'], meta['stride'], meta['dilation']
    N, _, T, V = x.shape
    res = x
    v_in = _conv1x1(x, *params['convV'])              # (N, rel, T, V)

    # (review) unfold and channel-mean commute: unfold only the 1-channel mean.
    xm = jnp.mean(x, axis=1, keepdims=True)           # (N, 1, T, V)
    xm_unf = unfold_temporal_windows(xm, ks, stride, dilation, pad=True,
                                     window_major=True)   # (N, 1, ws, L, V)
    xm_w = xm_unf[:, 0]                                # (N, ws, L, V)
    L = xm_w.shape[2]
    weights = jnp.tanh(_conv1x1(xm_w, *params['convW'])     # (N, ks*ks, L, V)
                       .reshape(N, ks, ks, L, V))           # (n, w, u, l, v)

    if stride == 1:
        # (review) fuse unfold(v) with the einsum: the 'w' index only appears in
        # `weights`, so pre-sum it on the tiny weights tensor and apply the
        # per-(u, l, v) weights inside the fused kernel — v_unf never hits HBM.
        wsum = jnp.sum(weights, axis=1)                # (N, ks, L, V)
        out = unfold_weighted_sum(v_in, wsum, ks, dilation, pad=True)
    else:
        # TODO(synk): fused unfold+einsum kernel covers stride==1 only; stride>1
        # falls back to materializing unfold(v) (Pallas) + XLA einsum.
        v_unf = unfold_temporal_windows(v_in, ks, stride, dilation, pad=True)
        out = jnp.einsum('nwulv,ncluv->nclv', weights, v_unf)

    return _post_attention(out, res, params, meta)


def temporal_attention_conv_forward_ref(params, meta, x):
    """Literal transcription of the PyTorch forward (pure-JAX reference)."""
    ks, stride, dilation = meta['ks'], meta['stride'], meta['dilation']
    res = x
    unfold = functools.partial(unfold_temporal_windows_ref, window_size=ks,
                               window_stride=stride, window_dilation=dilation,
                               pad=True)
    x_unf = unfold(x)                                  # (N, Cin, L, ws, V)
    v_unf = unfold(_conv1x1(x, *params['convV']))      # (N, rel, L, ws, V)
    N, _, L, W, V = x_unf.shape
    xm = jnp.transpose(jnp.mean(x_unf, axis=1), (0, 2, 1, 3))   # (N, ws, L, V)
    weights = jnp.tanh(_conv1x1(xm, *params['convW']).reshape(N, W, W, L, V))
    out = jnp.einsum('nwulv,ncluv->nclv', weights, v_unf)
    return _post_attention(out, res, params, meta)


# ---------------------------------------------------------------------------
# Demo / self-check
# ---------------------------------------------------------------------------

if __name__ == "__main__":
    key = jax.random.PRNGKey(0)
    k_x, k_p = jax.random.split(key)

    # Small but representative shapes: (N, C, T, V).
    N, C, T, V = 2, 16, 16, 16
    x = jax.random.normal(k_x, (N, C, T, V), dtype=jnp.float32)

    # --- 1) standalone unfold kernel checks (flat lane-dense path, dilated
    #        path, and strided fallback path) ---
    for (w_s, w_st, w_dl) in ((3, 1, 1), (3, 1, 2), (3, 2, 2)):
        fn = jax.jit(functools.partial(unfold_temporal_windows, window_size=w_s,
                                       window_stride=w_st, window_dilation=w_dl,
                                       pad=True))
        out = jax.block_until_ready(fn(x))
        ref = unfold_temporal_windows_ref(x, w_s, w_st, w_dl, pad=True)
        assert out.shape == ref.shape, (out.shape, ref.shape)
        assert jnp.allclose(out, ref, atol=1e-6, rtol=1e-6), \
            f"unfold mismatch (ws={w_s}, stride={w_st}, dilation={w_dl})"

    # --- 2) fused unfold + weighted-sum kernel vs (reference unfold + einsum) ---
    ks = 3
    rel_demo = 4
    k_v, k_w = jax.random.split(k_x)
    v_small = jax.random.normal(k_v, (N, rel_demo, T, V), dtype=jnp.float32)
    _, L = _unfold_geometry(T, ks, 1, 1, True)
    wsum = jax.random.normal(k_w, (N, ks, L, V), dtype=jnp.float32)
    fused = jax.block_until_ready(
        jax.jit(functools.partial(unfold_weighted_sum, window_size=ks,
                                  window_dilation=1, pad=True))(v_small, wsum))
    v_unf_ref = unfold_temporal_windows_ref(v_small, ks, 1, 1, True)
    fused_ref = jnp.einsum('nulv,ncluv->nclv', wsum, v_unf_ref)
    assert fused.shape == fused_ref.shape, (fused.shape, fused_ref.shape)
    assert jnp.allclose(fused, fused_ref, atol=1e-5, rtol=1e-5), \
        "fused unfold+weighted-sum mismatch"

    # --- 3) full TemporalAttentionConv forward: Pallas vs pure-JAX reference ---
    in_channels, out_channels, ks, stride, dilation = 16, 32, 3, 1, 1
    params, meta = init_temporal_attention_conv(k_p, in_channels, out_channels,
                                                ks, stride, dilation)
    fwd_pallas = jax.jit(lambda p, xx: temporal_attention_conv_forward(p, meta, xx))
    fwd_ref = jax.jit(lambda p, xx: temporal_attention_conv_forward_ref(p, meta, xx))
    y = jax.block_until_ready(fwd_pallas(params, x))
    y_ref = jax.block_until_ready(fwd_ref(params, x))
    assert y.shape == (N, out_channels, L, V), y.shape
    assert jnp.allclose(y, y_ref, atol=1e-4, rtol=1e-4), \
        "forward mismatch vs reference"

    print("KERNEL_OK")
</pallas_src>

<mosaic_0001>
module attributes {stable_mosaic.version = 11 : i64} {
  func.func @kernel(%arg0: i32, %arg1: i32, %arg2: memref<1x8x256xf32, #tpu.memory_space<vmem>>, %arg3: memref<1x8x768xf32, #tpu.memory_space<vmem>>) attributes {dimension_semantics = [#tpu.dimension_semantics<parallel>, #tpu.dimension_semantics<parallel>], iteration_bounds = array<i64: 2, 2>, scalar_prefetch = 0 : i64, scratch_operands = 0 : i64, tpu.core_type = #tpu.core_type<tc>, window_params = [{transform_indices = @transform_0, window_bounds = array<i64: 1, 8, 256>}, {transform_indices = @transform_1, window_bounds = array<i64: 1, 8, 768>}]} {
    %cst = arith.constant 0.000000e+00 : f32
    %0 = vector.broadcast %cst : f32 to vector<8x16xf32>
    %c0 = arith.constant 0 : index
    %c0_0 = arith.constant 0 : index
    %c0_1 = arith.constant 0 : index
    %1 = vector.load %arg3[%c0, %c0_0, %c0_1] : memref<1x8x768xf32, #tpu.memory_space<vmem>>, vector<1x8x16xf32>
    %2 = vector.shape_cast %1 : vector<1x8x16xf32> to vector<8x16xf32>
    %3 = vector.shape_cast %0 : vector<8x16xf32> to vector<1x8x16xf32>
    tpu.vector_store %arg3[%c0, %c0_0, %c0_1], %3 {strides = array<i32>} : memref<1x8x768xf32, #tpu.memory_space<vmem>>, vector<1x8x16xf32>,
    %c0_2 = arith.constant 0 : index
    %c0_3 = arith.constant 0 : index
    %c0_4 = arith.constant 0 : index
    %4 = vector.load %arg2[%c0_2, %c0_3, %c0_4] : memref<1x8x256xf32, #tpu.memory_space<vmem>>, vector<1x8x240xf32>
    %5 = vector.shape_cast %4 : vector<1x8x240xf32> to vector<8x240xf32>
    %c0_5 = arith.constant 0 : index
    %c0_6 = arith.constant 0 : index
    %c16 = arith.constant 16 : index
    %6 = vector.load %arg3[%c0_5, %c0_6, %c16] : memref<1x8x768xf32, #tpu.memory_space<vmem>>, vector<1x8x240xf32>
    %7 = vector.shape_cast %6 : vector<1x8x240xf32> to vector<8x240xf32>
    %8 = vector.shape_cast %5 : vector<8x240xf32> to vector<1x8x240xf32>
    tpu.vector_store %arg3[%c0_5, %c0_6, %c16], %8 {strides = array<i32>} : memref<1x8x768xf32, #tpu.memory_space<vmem>>, vector<1x8x240xf32>,
    %c0_7 = arith.constant 0 : index
    %c0_8 = arith.constant 0 : index
    %c0_9 = arith.constant 0 : index
    %9 = vector.load %arg2[%c0_7, %c0_8, %c0_9] : memref<1x8x256xf32, #tpu.memory_space<vmem>>, vector<1x8x256xf32>
    %10 = vector.shape_cast %9 : vector<1x8x256xf32> to vector<8x256xf32>
    %c0_10 = arith.constant 0 : index
    %c0_11 = arith.constant 0 : index
    %c256 = arith.constant 256 : index
    %11 = vector.load %arg3[%c0_10, %c0_11, %c256] : memref<1x8x768xf32, #tpu.memory_space<vmem>>, vector<1x8x256xf32>
    %12 = vector.shape_cast %11 : vector<1x8x256xf32> to vector<8x256xf32>
    %13 = vector.shape_cast %10 : vector<8x256xf32> to vector<1x8x256xf32>
    tpu.vector_store %arg3[%c0_10, %c0_11, %c256], %13 {strides = array<i32>} : memref<1x8x768xf32, #tpu.memory_space<vmem>>, vector<1x8x256xf32>,
    %cst_12 = arith.constant 0.000000e+00 : f32
    %14 = vector.broadcast %cst_12 : f32 to vector<8x16xf32>
    %c0_13 = arith.constant 0 : index
    %c0_14 = arith.constant 0 : index
    %c752 = arith.constant 752 : index
    %15 = vector.load %arg3[%c0_13, %c0_14, %c752] : memref<1x8x768xf32, #tpu.memory_space<vmem>>, vector<1x8x16xf32>
    %16 = vector.shape_cast %15 : vector<1x8x16xf32> to vector<8x16xf32>
    %17 = vector.shape_cast %14 : vector<8x16xf32> to vector<1x8x16xf32>
    tpu.vector_store %arg3[%c0_13, %c0_14, %c752], %17 {strides = array<i32>} : memref<1x8x768xf32, #tpu.memory_space<vmem>>, vector<1x8x16xf32>,
    %c0_15 = arith.constant 0 : index
    %c0_16 = arith.constant 0 : index
    %c16_17 = arith.constant 16 : index
    %18 = vector.load %arg2[%c0_15, %c0_16, %c16_17] : memref<1x8x256xf32, #tpu.memory_space<vmem>>, vector<1x8x240xf32>
    %19 = vector.shape_cast %18 : vector<1x8x240xf32> to vector<8x240xf32>
    %c0_18 = arith.constant 0 : index
    %c0_19 = arith.constant 0 : index
    %c512 = arith.constant 512 : index
    %20 = vector.load %arg3[%c0_18, %c0_19, %c512] : memref<1x8x768xf32, #tpu.memory_space<vmem>>, vector<1x8x240xf32>
    %21 = vector.shape_cast %20 : vector<1x8x240xf32> to vector<8x240xf32>
    %22 = vector.shape_cast %19 : vector<8x240xf32> to vector<1x8x240xf32>
    tpu.vector_store %arg3[%c0_18, %c0_19, %c512], %22 {strides = array<i32>} : memref<1x8x768xf32, #tpu.memory_space<vmem>>, vector<1x8x240xf32>,
    return
  }
  func.func @transform_0(%arg0: i32, %arg1: i32) -> (i32, i32, i32) {
    %c0_i32 = arith.constant 0 : i32
    %c0_i32_0 = arith.constant 0 : i32
    return %arg0, %arg1, %c0_i32 : i32, i32, i32
  }
  func.func @transform_1(%arg0: i32, %arg1: i32) -> (i32, i32, i32) {
    %c0_i32 = arith.constant 0 : i32
    %c0_i32_0 = arith.constant 0 : i32
    return %arg0, %arg1, %c0_i32 : i32, i32, i32
  }
}

</mosaic_0001>

<llo_original>
// kernel: unfold_temporal_windows.1
$region0: #{unfold_temporal_windows.1}
  #allocation0 [shape = 'u32[]', space=smem, size = 0x4, offset = 0x4, fixed_abs, tag = 'smem constant byte address 0x4 - core index']
  #allocation1 [shape = 'u32[144,128]{1,0:T(1,128)}', space=vmem, size = 0x12000, scoped, tag = 'internal scratch']
  %s0 = inlined_call_operand.vmem [shape: f32[2,16,256], index: 0, kind: input, shape index: {}]
  %s1 = inlined_call_operand.vmem [shape: f32[2,16,768], index: 1, kind: output, shape index: {}]
  %s2 = sld [smem:[#allocation0]]
  $region37: #{unfold_temporal_windows.1} parent=0
    _
  %s4 = ssub.s32 1, %s2
  %s5 = scalar_select 0, %s4, %s2
  loop: start=0, step=1, limit=6
  $region2: #{unfold_temporal_windows.1} parent=0 // loop_pre_header
    _
  $region3: #{unfold_temporal_windows.1} parent=0 // loop_header
    %s7 = sphi 0, %s11
    %p8 = scmp.ge.s32.totalorder %s7, 6
    %s14 = sphi 0, %s26
    %s15 = sphi 0, %s22
    %s16 = sphi 0, %s14
    %s17 = sphi 0, %s15
    %s18 = sphi 0, %s16
    %s19 = sphi 0, %s17
    %s31 = sphi 0, %s33
    %s34 = sphi 0, %s31
    %s35 = sphi 0, %s34
    %s51 = sphi 0, %s35
    %s59 = sphi 0, %s61
    %s62 = sphi 0, %s59
    %s63 = sphi 0, %s62
    %s79 = sphi 0, %s63
  $region4: #{unfold_temporal_windows.1} parent=0 // loop_header_branch
    %10 = sbr.rel (%p8) target = $region8
  $region5: #{unfold_temporal_windows.1} parent=0 // loop_body
    %s12 = ssub.s32 %s7, 1
    %s13 = ssub.s32 %s7, 2
    %s20 = sadd.s32 1, %s15
    %p21 = scmp.ge.s32.totalorder %s20, 2
    %s22 = scalar_select %p21, 0, %s20
    %s23 = sadd.s32 1, %s14
    %s24 = scalar_select %p21, %s23, %s14
    %p25 = scmp.ge.s32.totalorder %s24, 2
    %s26 = scalar_select %p25, 0, %s24
    %s27 = ssub.s32 %s14, %s26
    %s28 = ssub.s32 %s15, %s22
    %s29 = sor.u32 %s27, %s28
    %p30 = scmp.eq.s32.totalorder %s29, 0
    %s32 = sadd.s32 %s31, 1
    %s33 = scalar_select %p30, %s31, %s32
    %p36 = pneg %p30
    %p37 = scmp.eq.s32.totalorder %s7, 3
    %p38 = por %p36, %p37
    %p39 = scmp.ne.s32.totalorder %s31, %s34
    %p40 = scmp.eq.s32.totalorder %s7, 0
    %p41 = por %p39, %p40
    %p42 = scmp.ne.s32.totalorder %s31, %s34
    %p43 = scmp.eq.s32.totalorder %s12, 3
    %p44 = por %p42, %p43
    %p45 = scmp.ne.s32.totalorder %s34, %s35
    %p46 = scmp.eq.s32.totalorder %s12, 0
    %p47 = por %p45, %p46
    %p48 = scmp.ne.s32.totalorder %s34, %s35
    %p49 = scmp.eq.s32.totalorder %s13, 3
    %p50 = por %p48, %p49
    %p52 = scmp.ne.s32.totalorder %s35, %s51
    %p53 = scmp.eq.s32.totalorder %s13, 0
    %p54 = por %p52, %p53
    %s55 = ssub.s32 %s14, %s26
    %s56 = ssub.s32 %s15, %s22
    %s57 = sor.u32 %s55, %s56
    %p58 = scmp.eq.s32.totalorder %s57, 0
    %s60 = sadd.s32 %s59, 1
    %s61 = scalar_select %p58, %s59, %s60
    %p64 = pneg %p58
    %p65 = scmp.eq.s32.totalorder %s7, 3
    %p66 = por %p64, %p65
    %p67 = scmp.ne.s32.totalorder %s59, %s62
    %p68 = scmp.eq.s32.totalorder %s7, 0
    %p69 = por %p67, %p68
    %p70 = scmp.ne.s32.totalorder %s59, %s62
    %p71 = scmp.eq.s32.totalorder %s12, 3
    %p72 = por %p70, %p71
    %p73 = scmp.ne.s32.totalorder %s62, %s63
    %p74 = scmp.eq.s32.totalorder %s12, 0
    %p75 = por %p73, %p74
    %p76 = scmp.ne.s32.totalorder %s62, %s63
    %p77 = scmp.eq.s32.totalorder %s13, 3
    %p78 = por %p76, %p77
    %p80 = scmp.ne.s32.totalorder %s63, %s79
    %p81 = scmp.eq.s32.totalorder %s13, 0
    %p82 = por %p80, %p81
    %p83 = scmp.le.s32.totalorder 1, %s7
    %p84 = scmp.lt.s32.totalorder %s7, 5
    %p85 = pnand %p83, %p84
    %p86 = pneg %p85
    // Predicated region
    $region9: #{unfold_temporal_windows.1} parent=5 // pred_check
      _
    $region10: #{unfold_temporal_windows.1} parent=5 // pred_check_branch
      %88 = sbr.rel (%p85) target = $region12
    $region11: #{unfold_temporal_windows.1} parent=5 // pred_region
      %s89 = ssub.s32 %s7, 1
    $region12: #{unfold_temporal_windows.1} parent=5 // pred_fallthru
      _
    %p90 = scmp.lt.s32.totalorder %s7, 4
    // Predicated region
    $region13: #{unfold_temporal_windows.1} parent=5 // pred_check
      %p91 = pneg %p90
    $region14: #{unfold_temporal_windows.1} parent=5 // pred_check_branch
      %93 = sbr.rel (%p91) target = $region16
    $region15: #{unfold_temporal_windows.1} parent=5 // pred_region
      // Predicated region
      $region17: #{unfold_temporal_windows.1} parent=15 // pred_check
        %p94 = pneg %p41
      $region18: #{unfold_temporal_windows.1} parent=15 // pred_check_branch
        %96 = sbr.rel (%p94) target = $region20
      $region19: #{unfold_temporal_windows.1} parent=15 // pred_region
        %p97 = scmp.lt.s32.totalorder %s14, 1
        %s98 = scalar_select %p97, %s14, 1
        %p99 = scmp.lt.s32.totalorder %s15, 1
        %s100 = scalar_select %p99, %s15, 1
        %s101 = smul.addr %s100, 2
        %s102 = smul.addr %s98, 4
        %s103 = sadd.s32 %s101, %s102
        %s104 = smul.addr %s103, 8
        %s105 = scalar_lea.vmem %s0, %s104
      $region20: #{unfold_temporal_windows.1} parent=15 // pred_fallthru
        _
    $region16: #{unfold_temporal_windows.1} parent=5 // pred_fallthru
      _
    %p106 = scmp.le.s32.totalorder 1, %s7
    %p107 = scmp.lt.s32.totalorder %s7, 5
    %p108 = pnand %p106, %p107
    %p109 = pneg %p108
    // Predicated region
    $region21: #{unfold_temporal_windows.1} parent=5 // pred_check
      _
    $region22: #{unfold_temporal_windows.1} parent=5 // pred_check_branch
      %111 = sbr.rel (%p108) target = $region24
    $region23: #{unfold_temporal_windows.1} parent=5 // pred_region
      %s112 = ssub.s32 %s7, 1
      %p113 = scmp.lt.s32.totalorder %s16, 1
      %s114 = scalar_select %p113, %s16, 1
      %p115 = scmp.lt.s32.totalorder %s17, 1
      %s116 = scalar_select %p115, %s17, 1
      %s117 = smul.addr %s116, 2
      %s118 = smul.addr %s114, 4
      %s119 = sadd.s32 %s117, %s118
      %s120 = smul.addr %s119, 8
      %s121 = scalar_lea.vmem %s0, %s120
      %p122 = pneg %p47
      %p123 = pneg %p44
      %p124 = pneg %p75
      %p125 = pneg %p72
      %p126 = scmp.lt.s32.totalorder %s16, 1
      %s127 = scalar_select %p126, %s16, 1
      %p128 = scmp.lt.s32.totalorder %s17, 1
      %s129 = scalar_select %p128, %s17, 1
      %s130 = smul.addr %s129, 6
      %s131 = smul.addr %s127, 12
      %s132 = sadd.s32 %s130, %s131
      %s133 = smul.addr %s132, 8
      %s134 = scalar_lea.vmem %s1, %s133
      %p135 = scmp.lt.s32.totalorder %s16, 1
      %s136 = scalar_select %p135, %s16, 1
      %p137 = scmp.lt.s32.totalorder %s17, 1
      %s138 = scalar_select %p137, %s17, 1
      %s139 = smul.addr %s138, 2
      %s140 = smul.addr %s136, 4
      %s141 = sadd.s32 %s139, %s140
      %s142 = smul.addr %s141, 8
      %s143 = scalar_lea.vmem %s0, %s142
      %p144 = scmp.lt.s32.totalorder %s16, 1
      %s145 = scalar_select %p144, %s16, 1
      %p146 = scmp.lt.s32.totalorder %s17, 1
      %s147 = scalar_select %p146, %s17, 1
      %s148 = smul.addr %s147, 6
      %s149 = smul.addr %s145, 12
      %s150 = sadd.s32 %s148, %s149
      %s151 = smul.addr %s150, 8
      %s152 = scalar_lea.vmem %s1, %s151
      %vm153 = vcmask 130048
      %154 = vst.msk [vmem:[%s152] sm:$0xff] %vm153, 0.0
      %v155 = vld [vmem:[%s143] sm:$0xff]
      %v156 = vld [vmem:[%s143 + $0x8] sm:$0xff]
      %159 = vrot.lane.b32.xlu0 %v155, 16
      %v160 = vpop.permute.xlu0 %159
      %161 = vrot.lane.b32.xlu0 %v156, 16
      %v162 = vpop.permute.xlu0 %161
      %v163 = vsel %vm153, %v160, %v162
      %vm166 = vcmask 1047680
      %167 = vst.msk [vmem:[%s152] sm:$0xff] %vm166, %v160
      %168 = vst [vmem:[%s152 + $0x8] sm:$0xff] %v163
      %v169 = vld [vmem:[%s143] sm:$0xff]
      %v170 = vld [vmem:[%s143 + $0x8] sm:$0xff]
      %171 = vst [vmem:[%s152 + $0x10] sm:$0xff] %v169
      %172 = vst [vmem:[%s152 + $0x18] sm:$0xff] %v170
      %vm173 = vcmask 1048448
      %174 = vst.msk [vmem:[%s152 + $0x28] sm:$0xff] %vm173, 0.0
      %v175 = vld [vmem:[%s143] sm:$0xff]
      %v176 = vld [vmem:[%s143 + $0x8] sm:$0xff]
      %179 = vrot.lane.b32.xlu0 %v175, 112
      %v180 = vpop.permute.xlu0 %179
      %181 = vrot.lane.b32.xlu0 %v176, 112
      %v182 = vpop.permute.xlu0 %181
      %vm183 = vcmask 916480
      %v184 = vsel %vm183, %v180, %v182
      %187 = vst [vmem:[%s152 + $0x20] sm:$0xff] %v184
      %188 = vst.msk [vmem:[%s152 + $0x28] sm:$0xff] %vm183, %v182
      %p189 = scmp.lt.s32.totalorder %s16, 1
      %s190 = scalar_select %p189, %s16, 1
      %p191 = scmp.lt.s32.totalorder %s17, 1
      %s192 = scalar_select %p191, %s17, 1
      %s193 = smul.addr %s192, 6
      %s194 = smul.addr %s190, 12
      %s195 = sadd.s32 %s193, %s194
      %s196 = smul.addr %s195, 8
      %s197 = scalar_lea.vmem %s1, %s196
      // Predicated region
      $region25: #{unfold_temporal_windows.1} parent=23 // pred_check
        %p198 = pneg %p72
      $region26: #{unfold_temporal_windows.1} parent=23 // pred_check_branch
        %200 = sbr.rel (%p198) target = $region28
      $region27: #{unfold_temporal_windows.1} parent=23 // pred_region
        _
      $region28: #{unfold_temporal_windows.1} parent=23 // pred_fallthru
        _
    $region24: #{unfold_temporal_windows.1} parent=5 // pred_fallthru
      _
    %p201 = scmp.le.s32.totalorder 2, %s7
    // Predicated region
    $region29: #{unfold_temporal_windows.1} parent=5 // pred_check
      %p202 = pneg %p201
    $region30: #{unfold_temporal_windows.1} parent=5 // pred_check_branch
      %204 = sbr.rel (%p202) target = $region32
    $region31: #{unfold_temporal_windows.1} parent=5 // pred_region
      %s205 = ssub.s32 %s7, 2
      // Predicated region
      $region33: #{unfold_temporal_windows.1} parent=31 // pred_check
        %p206 = pneg %p78
      $region34: #{unfold_temporal_windows.1} parent=31 // pred_check_branch
        %208 = sbr.rel (%p206) target = $region36
      $region35: #{unfold_temporal_windows.1} parent=31 // pred_region
        %p209 = scmp.lt.s32.totalorder %s18, 1
        %s210 = scalar_select %p209, %s18, 1
        %p211 = scmp.lt.s32.totalorder %s19, 1
        %s212 = scalar_select %p211, %s19, 1
        %s213 = smul.addr %s212, 6
        %s214 = smul.addr %s210, 12
        %s215 = sadd.s32 %s213, %s214
        %s216 = smul.addr %s215, 8
        %s217 = scalar_lea.vmem %s1, %s216
      $region36: #{unfold_temporal_windows.1} parent=31 // pred_fallthru
        _
    $region32: #{unfold_temporal_windows.1} parent=5 // pred_fallthru
      _
  $region6: #{unfold_temporal_windows.1} parent=0 // loop_footer
    %s11 = sadd.s32 1, %s7
  $region7: #{unfold_temporal_windows.1} parent=0 // loop_footer_branch
    %6 = sbr.rel target = $region3
  $region8: #{unfold_temporal_windows.1} parent=0 // loop_exit
    _

</llo_original>
